<compile_context>
chip_gen: v5e
topology: v5e:2x2
jax: 0.10.0
libtpu: 0.0.40
codegen_flags: <defaults>
</compile_context>

<pallas_src>
import functools

import jax
import jax.numpy as jnp
from jax.experimental import pallas as pl
from jax.experimental.pallas import tpu as pltpu


def _round_up(x: int, m: int) -> int:
    return ((x + m - 1) // m) * m


def _bce_weighted_kernel(logits_ref, labels_ref, o_ref, *,
                         weight: float, n_rows: int, tm: int):
    c = pl.program_id(0)                # core-split axis (parallel)
    i = pl.program_id(1)                # row-block axis (arbitrary / reduction)
    blocks_per_core = pl.num_programs(1)

    x = logits_ref[...].astype(jnp.float32)
    y = labels_ref[...].astype(jnp.float32)

    # Numerically-stable BCE-with-logits (PyTorch formulation):
    #   max(x, 0) - x*y + log1p(exp(-|x|))
    loss = jnp.maximum(x, 0.0) - x * y + jnp.log1p(jnp.exp(-jnp.abs(x)))

    # loss[labels.bool()] *= labels[labels.bool()] * weight
    scale = jnp.where(y != 0.0, y * weight, 1.0)
    loss = loss * scale

    # Mask rows beyond the logical row count (padded / out-of-range tiles
    # contribute exactly 0 to the sum).
    block_idx = c * blocks_per_core + i
    row0 = block_idx * tm
    row_ids = row0 + jax.lax.broadcasted_iota(jnp.int32, loss.shape, 0)
    loss = jnp.where(row_ids < n_rows, loss, 0.0)

    # Vreg-shaped partial sum: (tm, D) -> (tm//8, 8, D) -> sum over axis 0.
    # This is pure VPU adds (no cross-lane XLU reduce inside the hot loop).
    partial = jnp.sum(loss.reshape(tm // 8, 8, loss.shape[-1]), axis=0)

    @pl.when(i == 0)
    def _():
        o_ref[...] = jnp.zeros_like(o_ref)

    o_ref[...] += partial


def bce_with_logits_loss_weighted(logits, labels, weight: float, *,
                                  tm: int = 4096):
    """Scalar mean of the weighted elementwise BCE-with-logits loss."""
    assert logits.shape == labels.shape
    N, D = logits.shape

    # Row tile: multiple of 8 sublanes, capped at the (rounded-up) row count.
    tm_eff = min(_round_up(tm, 8), _round_up(N, 8))

    num_blocks = pl.cdiv(N, tm_eff)
    num_cores = 2 if num_blocks > 1 else 1   # v7x megacore split; no-op on 1-TC chips
    blocks_per_core = pl.cdiv(num_blocks, num_cores)
    max_block = num_blocks - 1

    def in_map(c, i):
        # Clamp so over-provisioned (c, i) pairs never DMA out of bounds; the
        # in-kernel logical-row mask zeroes their contribution anyway.
        return (jnp.minimum(c * blocks_per_core + i, max_block), 0)

    kernel = functools.partial(
        _bce_weighted_kernel, weight=float(weight), n_rows=N, tm=tm_eff)

    partials = pl.pallas_call(
        kernel,
        out_shape=jax.ShapeDtypeStruct((num_cores, 8, D), jnp.float32),
        grid_spec=pltpu.PrefetchScalarGridSpec(
            num_scalar_prefetch=0,
            grid=(num_cores, blocks_per_core),
            in_specs=[
                pl.BlockSpec((tm_eff, D), in_map),
                pl.BlockSpec((tm_eff, D), in_map),
            ],
            # One lane-dense (8, D) partial-sum slab per core; resident across
            # the reduction axis (index_map ignores i).
            out_specs=pl.BlockSpec((None, 8, D), lambda c, i: (c, 0, 0)),
        ),
        compiler_params=pltpu.CompilerParams(
            dimension_semantics=("parallel", "arbitrary")),
    )(logits, labels)

    # Tiny final reduction + mean outside the kernel.
    return jnp.sum(partials) / (N * D)


def _reference(logits, labels, weight):
    x = logits.astype(jnp.float32)
    y = labels.astype(jnp.float32)
    loss = jnp.maximum(x, 0.0) - x * y + jnp.log1p(jnp.exp(-jnp.abs(x)))
    loss = jnp.where(y != 0.0, loss * (y * weight), loss)
    return jnp.mean(loss)


if __name__ == "__main__":
    key = jax.random.PRNGKey(0)
    k1, k2, k3, k4 = jax.random.split(key, 4)
    weight = 3.0

    # Case 1: small aligned shape (single tile).
    N, D = 16, 128
    logits = jax.random.normal(k1, (N, D), dtype=jnp.float32)
    labels = jax.random.bernoulli(k2, p=0.3, shape=(N, D)).astype(jnp.float32)
    loss = jax.block_until_ready(
        bce_with_logits_loss_weighted(logits, labels, weight))
    ref = _reference(logits, labels, weight)
    assert jnp.allclose(loss, ref, rtol=1e-5, atol=1e-5), (loss, ref)

    # Case 2: ragged row count + multi-block grid (exercises the row mask and
    # the 2-way core-split axis with an over-provisioned final block).
    N2, D2 = 300, 128
    logits2 = jax.random.normal(k3, (N2, D2), dtype=jnp.float32)
    labels2 = jax.random.bernoulli(k4, p=0.3, shape=(N2, D2)).astype(jnp.float32)
    loss2 = jax.block_until_ready(
        bce_with_logits_loss_weighted(logits2, labels2, weight, tm=128))
    ref2 = _reference(logits2, labels2, weight)
    assert jnp.allclose(loss2, ref2, rtol=1e-5, atol=1e-5), (loss2, ref2)

    print("KERNEL_OK")
</pallas_src>

<mosaic_0001>
module attributes {stable_mosaic.version = 11 : i64} {
  func.func @_bce_weighted_kernel(%arg0: i32, %arg1: i32, %arg2: memref<16x128xf32, #tpu.memory_space<vmem>>, %arg3: memref<16x128xf32, #tpu.memory_space<vmem>>, %arg4: memref<1x8x128xf32, #tpu.memory_space<vmem>>) attributes {dimension_semantics = [#tpu.dimension_semantics<parallel>, #tpu.dimension_semantics<arbitrary>], iteration_bounds = array<i64: 1, 1>, scalar_prefetch = 0 : i64, scratch_operands = 0 : i64, tpu.core_type = #tpu.core_type<tc>, window_params = [{transform_indices = @transform_0, window_bounds = array<i64: 16, 128>}, {transform_indices = @transform_1, window_bounds = array<i64: 16, 128>}, {transform_indices = @transform_2, window_bounds = array<i64: 1, 8, 128>}]} {
    %c0 = arith.constant 0 : index
    %c0_0 = arith.constant 0 : index
    %0 = vector.load %arg2[%c0, %c0_0] : memref<16x128xf32, #tpu.memory_space<vmem>>, vector<16x128xf32>
    %c0_1 = arith.constant 0 : index
    %c0_2 = arith.constant 0 : index
    %1 = vector.load %arg3[%c0_1, %c0_2] : memref<16x128xf32, #tpu.memory_space<vmem>>, vector<16x128xf32>
    %cst = arith.constant 0.000000e+00 : f32
    %2 = vector.broadcast %cst : f32 to vector<16x128xf32>
    %3 = arith.maximumf %0, %2 : vector<16x128xf32>
    %4 = arith.mulf %0, %1 : vector<16x128xf32>
    %5 = arith.subf %3, %4 : vector<16x128xf32>
    %6 = math.absf %0 : vector<16x128xf32>
    %cst_3 = arith.constant 0.000000e+00 : f32
    %7 = vector.broadcast %cst_3 : f32 to vector<16x128xf32>
    %8 = arith.subf %7, %6 : vector<16x128xf32>
    %9 = math.exp %8 : vector<16x128xf32>
    %10 = math.log1p %9 : vector<16x128xf32>
    %11 = arith.addf %5, %10 : vector<16x128xf32>
    %cst_4 = arith.constant 0.000000e+00 : f32
    %12 = vector.broadcast %cst_4 : f32 to vector<16x128xf32>
    %13 = arith.cmpf one, %1, %12 : vector<16x128xf32>
    %cst_5 = arith.constant 3.000000e+00 : f32
    %14 = vector.broadcast %cst_5 : f32 to vector<16x128xf32>
    %15 = arith.mulf %1, %14 : vector<16x128xf32>
    %cst_6 = arith.constant 1.000000e+00 : f32
    %16 = vector.broadcast %cst_6 : f32 to vector<16x128xf32>
    %17 = arith.select %13, %15, %16 : vector<16x128xi1>, vector<16x128xf32>
    %18 = arith.mulf %11, %17 : vector<16x128xf32>
    %c1_i32 = arith.constant 1 : i32
    %19 = arith.muli %arg0, %c1_i32 : i32
    %20 = arith.addi %19, %arg1 : i32
    %c16_i32 = arith.constant 16 : i32
    %21 = arith.muli %20, %c16_i32 : i32
    %22 = tpu.iota {dimensions = array<i32: 0>} : vector<16x128xi32>
    %23 = vector.broadcast %21 : i32 to vector<16x128xi32>
    %24 = arith.addi %23, %22 : vector<16x128xi32>
    %c16_i32_7 = arith.constant 16 : i32
    %25 = vector.broadcast %c16_i32_7 : i32 to vector<16x128xi32>
    %26 = arith.cmpi slt, %24, %25 : vector<16x128xi32>
    %cst_8 = arith.constant 0.000000e+00 : f32
    %27 = vector.broadcast %cst_8 : f32 to vector<16x128xf32>
    %28 = arith.select %26, %18, %27 : vector<16x128xi1>, vector<16x128xf32>
    %29 = vector.shape_cast %28 : vector<16x128xf32> to vector<2x8x128xf32>
    %cst_9 = arith.constant dense<0.000000e+00> : vector<8x128xf32>
    %30 = vector.multi_reduction <add>, %29, %cst_9 [0] : vector<2x8x128xf32> to vector<8x128xf32>
    %c0_i32 = arith.constant 0 : i32
    %31 = arith.cmpi eq, %arg1, %c0_i32 : i32
    %32 = arith.extui %31 : i1 to i32
    %c0_i32_10 = arith.constant 0 : i32
    %33 = arith.cmpi ne, %32, %c0_i32_10 : i32
    scf.if %33 {
      %cst_17 = arith.constant 0.000000e+00 : f32
      %40 = vector.broadcast %cst_17 : f32 to vector<8x128xf32>
      %c0_18 = arith.constant 0 : index
      %c0_19 = arith.constant 0 : index
      %c0_20 = arith.constant 0 : index
      %41 = vector.load %arg4[%c0_18, %c0_19, %c0_20] : memref<1x8x128xf32, #tpu.memory_space<vmem>>, vector<1x8x128xf32>
      %42 = vector.shape_cast %41 : vector<1x8x128xf32> to vector<8x128xf32>
      %43 = vector.shape_cast %40 : vector<8x128xf32> to vector<1x8x128xf32>
      tpu.vector_store %arg4[%c0_18, %c0_19, %c0_20], %43 {strides = array<i32>} : memref<1x8x128xf32, #tpu.memory_space<vmem>>, vector<1x8x128xf32>,
    } else {
    }
    %c0_11 = arith.constant 0 : index
    %c0_12 = arith.constant 0 : index
    %c0_13 = arith.constant 0 : index
    %34 = vector.load %arg4[%c0_11, %c0_12, %c0_13] : memref<1x8x128xf32, #tpu.memory_space<vmem>>, vector<1x8x128xf32>
    %35 = vector.shape_cast %34 : vector<1x8x128xf32> to vector<8x128xf32>
    %36 = arith.addf %35, %30 : vector<8x128xf32>
    %c0_14 = arith.constant 0 : index
    %c0_15 = arith.constant 0 : index
    %c0_16 = arith.constant 0 : index
    %37 = vector.load %arg4[%c0_14, %c0_15, %c0_16] : memref<1x8x128xf32, #tpu.memory_space<vmem>>, vector<1x8x128xf32>
    %38 = vector.shape_cast %37 : vector<1x8x128xf32> to vector<8x128xf32>
    %39 = vector.shape_cast %36 : vector<8x128xf32> to vector<1x8x128xf32>
    tpu.vector_store %arg4[%c0_14, %c0_15, %c0_16], %39 {strides = array<i32>} : memref<1x8x128xf32, #tpu.memory_space<vmem>>, vector<1x8x128xf32>,
    return
  }
  func.func @transform_0(%arg0: i32, %arg1: i32) -> (i32, i32) {
    %c1_i32 = arith.constant 1 : i32
    %0 = arith.muli %arg0, %c1_i32 : i32
    %1 = arith.addi %0, %arg1 : i32
    %c0_i32 = arith.constant 0 : i32
    %2 = arith.minsi %1, %c0_i32 : i32
    %c0_i32_0 = arith.constant 0 : i32
    %c0_i32_1 = arith.constant 0 : i32
    return %2, %c0_i32_0 : i32, i32
  }
  func.func @transform_1(%arg0: i32, %arg1: i32) -> (i32, i32) {
    %c1_i32 = arith.constant 1 : i32
    %0 = arith.muli %arg0, %c1_i32 : i32
    %1 = arith.addi %0, %arg1 : i32
    %c0_i32 = arith.constant 0 : i32
    %2 = arith.minsi %1, %c0_i32 : i32
    %c0_i32_0 = arith.constant 0 : i32
    %c0_i32_1 = arith.constant 0 : i32
    return %2, %c0_i32_0 : i32, i32
  }
  func.func @transform_2(%arg0: i32, %arg1: i32) -> (i32, i32, i32) {
    %c0_i32 = arith.constant 0 : i32
    %c0_i32_0 = arith.constant 0 : i32
    %c0_i32_1 = arith.constant 0 : i32
    return %arg0, %c0_i32, %c0_i32_0 : i32, i32, i32
  }
}

</mosaic_0001>

<llo_original>
// kernel: tpu_custom_call.1
$region0: #{tpu_custom_call.1}
  #allocation0 [shape = 'u32[]', space=smem, size = 0x4, offset = 0x4, fixed_abs, tag = 'smem constant byte address 0x4 - core index']
  #allocation1 [shape = 'u32[72,128]{1,0:T(1,128)}', space=vmem, size = 0x9000, scoped, tag = 'internal scratch']
  %s0 = inlined_call_operand.hbm [shape: f32[16,128], index: 0, kind: input, shape index: {}]
  %s1 = inlined_call_operand.hbm [shape: f32[16,128], index: 1, kind: input, shape index: {}]
  %s2 = inlined_call_operand.hbm [shape: f32[1,8,128], index: 2, kind: output, shape index: {}]
  %s3 = sld [smem:[#allocation0]]
  $region30: #{tpu_custom_call.1} parent=0
    _
  %s5 = ssub.s32 1, %s3
  %s6 = scalar_select 0, %s5, %s3
  $region1: #{tpu_custom_call.1} parent=0
    #allocation2 [shape = 'u8[8192]{0}', space=vmem, size = 0x2000, scoped, tag = 'input window, operand 0, single buffered']
    #allocation3 [shape = 's32[1]{0}', space=sflag, size = 0x4, scoped, tag = 'scoped memory for tpu_custom_call.1']
    #allocation4 [shape = 's32[1]{0}', space=sflag, size = 0x4, scoped, tag = 'scoped memory for tpu_custom_call.1']
    #allocation5 [shape = 'u8[8192]{0}', space=vmem, size = 0x2000, scoped, tag = 'input window, operand 1, single buffered']
    #allocation6 [shape = 's32[1]{0}', space=sflag, size = 0x4, scoped, tag = 'scoped memory for tpu_custom_call.1']
    #allocation7 [shape = 'u8[4096]{0}', space=vmem, size = 0x1000, scoped, tag = 'output window, operand 0, single buffered']
    %7 = vsyncpa [#allocation3], 0
    %8 = vsyncpa [#allocation6], 0
    %9 = vsyncpa [#allocation4], 0
    // Predicated region
    $region2: #{tpu_custom_call.1} parent=1 // pred_check
      _
    $region3: #{tpu_custom_call.1} parent=1 // pred_check_branch
      %11 = sbr.rel (0) target = $region5
    $region4: #{tpu_custom_call.1} parent=1 // pred_region
      %s12 = sadd.s32 0, 0
      %p13 = scmp.lt.s32.totalorder %s12, 0
      %s14 = scalar_select %p13, %s12, 0
      %s15 = smul.u32 2, %s14
      %17 = vsyncadd [#allocation3], 0
      %s18 = smul.addr %s15, 8
      %s19 = scalar_lea.hbm %s0, %s18
      %s20 = sshll.u32 %s19, 4
      %s21 = int_to_ptr.hbm [resolvable:$true] %s20
      %s22 = sshll.u32 [#allocation2], 4
      %s23 = int_to_ptr.vmem [resolvable:$true] %s22
      %28 = dma.hbm_to_vmem [thread:$0]  %s21, 256, %s23, [#allocation3], 128, 128, 8
    $region5: #{tpu_custom_call.1} parent=1 // pred_fallthru
      _
    // Predicated region
    $region6: #{tpu_custom_call.1} parent=1 // pred_check
      _
    $region7: #{tpu_custom_call.1} parent=1 // pred_check_branch
      %30 = sbr.rel (0) target = $region9
    $region8: #{tpu_custom_call.1} parent=1 // pred_region
      %s31 = sadd.s32 0, 0
      %p32 = scmp.lt.s32.totalorder %s31, 0
      %s33 = scalar_select %p32, %s31, 0
      %s34 = smul.u32 2, %s33
      %36 = vsyncadd [#allocation6], 0
      %s37 = smul.addr %s34, 8
      %s38 = scalar_lea.hbm %s1, %s37
      %s39 = sshll.u32 %s38, 4
      %s40 = int_to_ptr.hbm [resolvable:$true] %s39
      %s41 = sshll.u32 [#allocation5], 4
      %s42 = int_to_ptr.vmem [resolvable:$true] %s41
      %47 = dma.hbm_to_vmem [thread:$0]  %s40, 256, %s42, [#allocation6], 128, 128, 8
    $region9: #{tpu_custom_call.1} parent=1 // pred_fallthru
      _
    // Predicated region
    $region10: #{tpu_custom_call.1} parent=1 // pred_check
      _
    $region11: #{tpu_custom_call.1} parent=1 // pred_check_branch
      %49 = sbr.rel (0) target = $region13
    $region12: #{tpu_custom_call.1} parent=1 // pred_region
      %51 = dma.done [#allocation3], 256
    $region13: #{tpu_custom_call.1} parent=1 // pred_fallthru
      _
    // Predicated region
    $region14: #{tpu_custom_call.1} parent=1 // pred_check
      _
    $region15: #{tpu_custom_call.1} parent=1 // pred_check_branch
      %53 = sbr.rel (0) target = $region17
    $region16: #{tpu_custom_call.1} parent=1 // pred_region
      %55 = dma.done [#allocation6], 256
    $region17: #{tpu_custom_call.1} parent=1 // pred_fallthru
      _
    %s56 = sadd.s32 0, 0
    %p57 = scmp.lt.s32.totalorder %s56, 0
    %s58 = scalar_select %p57, %s56, 0
    %s59 = smul.u32 2, %s58
    %s60 = sadd.s32 0, 0
    %p61 = scmp.lt.s32.totalorder %s60, 0
    %s62 = scalar_select %p61, %s60, 0
    %s63 = smul.u32 2, %s62
    %v64 = vld [vmem:[#allocation2] sm:$0xff]
    %v65 = vld [vmem:[#allocation2 + $0x8] sm:$0xff]
    %v66 = vld [vmem:[#allocation5] sm:$0xff]
    %v67 = vld [vmem:[#allocation5 + $0x8] sm:$0xff]
    %v68 = vmax.f32 %v64, 0.0
    %v69 = vmax.f32 %v65, 0.0
    %v70 = vmul.f32 %v64, %v66
    %v71 = vmul.f32 %v65, %v67
    %v72 = vsub.f32 %v68, %v70
    %v73 = vsub.f32 %v69, %v71
    %v74 = vand.u32 2147483647, %v64
    %v75 = vand.u32 2147483647, %v65
    %v76 = vsub.f32 0.0, %v74
    %v77 = vsub.f32 0.0, %v75
    %v78 = vmul.f32 %v76, 1.442695
    %v79 = vpow.pop %v78
    %v80 = vmul.f32 %v77, 1.442695
    %v81 = vpow.pop %v80
    %v82 = vadd.f32 %v79, 1.0
    %v83 = vlog2.pop %v82
    %v84 = vmul.f32 %v83, 0.6931472
    %v85 = vmul.f32 -0.5, %v79
    %v86 = vadd.f32 %v85, 1.0
    %v87 = vmul.f32 %v86, %v79
    %v88 = vand.u32 2147483647, %v79
    %vm89 = vcmp.lt.f32.partialorder %v88, 0.0004427343
    %v90 = vsel %vm89, %v87, %v84
    %v91 = vadd.f32 %v81, 1.0
    %v92 = vlog2.pop %v91
    %v93 = vmul.f32 %v92, 0.6931472
    %v94 = vmul.f32 -0.5, %v81
    %v95 = vadd.f32 %v94, 1.0
    %v96 = vmul.f32 %v95, %v81
    %v97 = vand.u32 2147483647, %v81
    %vm98 = vcmp.lt.f32.partialorder %v97, 0.0004427343
    %v99 = vsel %vm98, %v96, %v93
    %v100 = vadd.f32 %v72, %v90
    %v101 = vadd.f32 %v73, %v99
    %vm102 = vcmp.ne.f32.partialorder %v66, 0.0
    %vm103 = vcmp.ne.f32.partialorder %v67, 0.0
    %v104 = vmul.f32 %v66, 3.0
    %v105 = vmul.f32 %v67, 3.0
    %v106 = vsel %vm102, %v104, 1.0
    %v107 = vsel %vm103, %v105, 1.0
    %v108 = vmul.f32 %v100, %v106
    %v109 = vmul.f32 %v101, %v107
    %s110 = sadd.s32 0, 0
    %s111 = smul.u32 %s110, 16
    %v112 = vlaneseq
    %v113 = vshrl.u32 %v112, 7
    %v114 = vadd.s32 %v113, 8
    %v115 = vstv %s111
    %v116 = vadd.s32 %v115, %v113
    %v117 = vadd.s32 %v115, %v114
    %vm118 = vcmp.lt.s32.totalorder %v116, 16
    %vm119 = vcmp.lt.s32.totalorder %v117, 16
    %v120 = vsel %vm118, %v108, 0.0
    %v121 = vsel %vm119, %v109, 0.0
    %v122 = vadd.f32 %v120, %v121
    %p123 = scmp.eq.s32.totalorder 0, 0
    // Predicated region
    $region18: #{tpu_custom_call.1} parent=1 // pred_check
      %p124 = pneg %p123
    $region19: #{tpu_custom_call.1} parent=1 // pred_check_branch
      %126 = sbr.rel (%p124) target = $region21
    $region20: #{tpu_custom_call.1} parent=1 // pred_region
      %127 = vst [vmem:[#allocation7] sm:$0xff] 0.0
    $region21: #{tpu_custom_call.1} parent=1 // pred_fallthru
      _
    %v128 = vld [vmem:[#allocation7] sm:$0xff]
    %v129 = vadd.f32 %v128, %v122
    %130 = vst [vmem:[#allocation7] sm:$0xff] %v129
    // Predicated region
    $region22: #{tpu_custom_call.1} parent=1 // pred_check
      _
    $region23: #{tpu_custom_call.1} parent=1 // pred_check_branch
      %132 = sbr.rel (0) target = $region25
    $region24: #{tpu_custom_call.1} parent=1 // pred_region
      %134 = vsyncadd [#allocation4], 0
      %s136 = sshll.u32 [#allocation7], 4
      %s137 = int_to_ptr.vmem [resolvable:$true] %s136
      %s138 = sshll.u32 %s2, 4
      %s139 = int_to_ptr.hbm [resolvable:$true] %s138
      %141 = dma.vmem_to_hbm [thread:$0]  %s137, 128, %s139, [#allocation4]
    $region25: #{tpu_custom_call.1} parent=1 // pred_fallthru
      _
    // Predicated region
    $region26: #{tpu_custom_call.1} parent=1 // pred_check
      _
    $region27: #{tpu_custom_call.1} parent=1 // pred_check_branch
      %143 = sbr.rel (0) target = $region29
    $region28: #{tpu_custom_call.1} parent=1 // pred_region
      %145 = dma.done [#allocation4], 128
    $region29: #{tpu_custom_call.1} parent=1 // pred_fallthru
      _
    %146 = vsyncpa [#allocation3], 1
    %147 = vsyncpa [#allocation6], 1
    %148 = vsyncpa [#allocation4], 1

</llo_original>
